<compile_context>
chip_gen: v5e
topology: v5e:2x2
jax: 0.10.0
libtpu: 0.0.40
codegen_flags: <defaults>
</compile_context>

<pallas_src>
import functools
import math

import jax
import jax.numpy as jnp
from jax.experimental import pallas as pl
from jax.experimental.pallas import tpu as pltpu

LN_EPS = 1e-12        # BertConfig.layer_norm_eps
MASK_VALUE = -1e9     # finite additive mask (no NaN even for fully-masked rows)


# ----------------------------- small helpers -------------------------------

def _pick_tile(dim, target):
    """Largest divisor of `dim` obtained by halving `target` (full dim if small).

    For typical BERT shapes (H=768, I=3072, M=B*S) this keeps K-tiles >= 256
    and M/N tiles multiples of 128 (v5e store-slot / MXU guidance); for the
    tiny demo shapes it simply returns the full dimension."""
    if dim <= target:
        return dim
    t = target
    while dim % t:
        t //= 2
    return t


def _compiler_params(sem, block_bytes):
    """dimension_semantics + a vmem limit derived from the double-buffered
    block footprint, clamped so it also fits v7x's 64 MiB physical VMEM."""
    limit = int(min(max(2 * block_bytes + (8 << 20), 32 << 20), 60 << 20))
    return pltpu.CompilerParams(dimension_semantics=sem, vmem_limit_bytes=limit)


def _erf(x):
    # Abramowitz & Stegun 7.1.26 polynomial erf, |abs err| <= 1.5e-7 (f32).
    # TODO(synk): switch to jax.lax.erf if/when a direct Mosaic lowering is
    # guaranteed; this keeps the exact-erf GELU semantics within f32 noise.
    a1, a2, a3, a4, a5 = (0.254829592, -0.284496736, 1.421413741,
                          -1.453152027, 1.061405429)
    p = 0.3275911
    ax = jnp.abs(x)
    t = 1.0 / (1.0 + p * ax)
    poly = ((((a5 * t + a4) * t + a3) * t + a2) * t + a1) * t
    y = 1.0 - poly * jnp.exp(-ax * ax)
    return jnp.where(x < 0.0, -y, y)


# ----------------------------- Pallas kernels ------------------------------

def _matmul_kernel(x_ref, w_ref, b_ref, o_ref, acc_ref, *, act):
    """Tiled (tm,tk)@(tk,tn) with f32 accumulation and fused bias/activation."""
    @pl.when(pl.program_id(2) == 0)
    def _():
        acc_ref[...] = jnp.zeros_like(acc_ref)

    acc_ref[...] += jnp.dot(x_ref[...], w_ref[...],
                            preferred_element_type=jnp.float32)

    @pl.when(pl.program_id(2) == pl.num_programs(2) - 1)
    def _():
        y = acc_ref[...] + b_ref[...].astype(jnp.float32)
        if act == "tanh":
            y = jnp.tanh(y)
        elif act == "gelu":
            y = 0.5 * y * (1.0 + _erf(y * (1.0 / math.sqrt(2.0))))
        o_ref[...] = y.astype(o_ref.dtype)


def linear(x, w, b, act=None, out_dtype=jnp.bfloat16):
    """x: (M, K), w: (K, N) bf16, b: (N,) f32 -> (M, N) out_dtype."""
    M, K = x.shape
    N = w.shape[1]
    tm = _pick_tile(M, 512)
    tn = _pick_tile(N, 512)
    tk = _pick_tile(K, 512)
    grid = (M // tm, N // tn, K // tk)
    block_bytes = 2 * (tm * tk + tk * tn + tm * tn) + 4 * (tm * tn + tn)
    return pl.pallas_call(
        functools.partial(_matmul_kernel, act=act),
        out_shape=jax.ShapeDtypeStruct((M, N), out_dtype),
        grid_spec=pltpu.PrefetchScalarGridSpec(
            num_scalar_prefetch=0,
            grid=grid,
            in_specs=[
                pl.BlockSpec((tm, tk), lambda i, j, k: (i, k)),
                pl.BlockSpec((tk, tn), lambda i, j, k: (k, j)),
                pl.BlockSpec((1, tn), lambda i, j, k: (0, j)),
            ],
            out_specs=pl.BlockSpec((tm, tn), lambda i, j, k: (i, j)),
            scratch_shapes=[pltpu.VMEM((tm, tn), jnp.float32)],
        ),
        compiler_params=_compiler_params(
            ("parallel", "parallel", "arbitrary"), block_bytes),
    )(x.astype(jnp.bfloat16), w, b.reshape(1, N))


def _ln_kernel(x_ref, g_ref, b_ref, o_ref):
    x = x_ref[...].astype(jnp.float32)
    mu = jnp.mean(x, axis=-1, keepdims=True)
    xc = x - mu
    var = jnp.mean(xc * xc, axis=-1, keepdims=True)
    o_ref[...] = (xc * jax.lax.rsqrt(var + LN_EPS) * g_ref[...]
                  + b_ref[...]).astype(o_ref.dtype)


def _add_ln_kernel(x_ref, r_ref, g_ref, b_ref, o_ref):
    # Fused residual add + LayerNorm (stats in f32).
    x = x_ref[...].astype(jnp.float32) + r_ref[...].astype(jnp.float32)
    mu = jnp.mean(x, axis=-1, keepdims=True)
    xc = x - mu
    var = jnp.mean(xc * xc, axis=-1, keepdims=True)
    o_ref[...] = (xc * jax.lax.rsqrt(var + LN_EPS) * g_ref[...]
                  + b_ref[...]).astype(o_ref.dtype)


def layernorm(x, g, b, residual=None, out_dtype=jnp.bfloat16):
    """LayerNorm(x [+ residual]) over the last dim, tiled over rows."""
    M, H = x.shape
    tm = _pick_tile(M, 1024)
    grid = (M // tm,)
    row_spec = pl.BlockSpec((tm, H), lambda i: (i, 0))
    vec_spec = pl.BlockSpec((1, H), lambda i: (0, 0))
    if residual is None:
        kernel, in_specs, args = _ln_kernel, [row_spec, vec_spec, vec_spec], \
            (x, g.reshape(1, H), b.reshape(1, H))
    else:
        kernel, in_specs, args = _add_ln_kernel, \
            [row_spec, row_spec, vec_spec, vec_spec], \
            (x, residual, g.reshape(1, H), b.reshape(1, H))
    block_bytes = 4 * (3 * tm * H + 2 * H)
    return pl.pallas_call(
        kernel,
        out_shape=jax.ShapeDtypeStruct((M, H), out_dtype),
        grid=grid,
        in_specs=in_specs,
        out_specs=row_spec,
        compiler_params=_compiler_params(("parallel",), block_bytes),
    )(*args)


def _attention_kernel(qkv_ref, m_ref, o_ref, *, n_heads, head_dim, scale):
    # One batch element per grid step. qkv block: (1, S, 3H); mask: (1, 1, S).
    H = n_heads * head_dim
    mask = m_ref[0]                                    # (1, S) f32, bcast over q
    ctxs = []
    for h in range(n_heads):                           # static unroll over heads
        lo = h * head_dim
        q = qkv_ref[0, :, lo:lo + head_dim]            # (S, d) bf16
        k = qkv_ref[0, :, H + lo:H + lo + head_dim]
        v = qkv_ref[0, :, 2 * H + lo:2 * H + lo + head_dim]
        s = jax.lax.dot_general(q, k, (((1,), (1,)), ((), ())),
                                preferred_element_type=jnp.float32) * scale
        s = s + mask
        s = s - jnp.max(s, axis=-1, keepdims=True)
        p = jnp.exp(s)
        inv = pl.reciprocal(jnp.sum(p, axis=-1, keepdims=True), approx=True)
        p = (p * inv).astype(v.dtype)
        ctxs.append(jnp.dot(p, v, preferred_element_type=jnp.float32))
    # single lane-dense (S, H) store
    o_ref[0] = jnp.concatenate(ctxs, axis=-1).astype(o_ref.dtype)


def attention(qkv, add_mask, n_heads, head_dim):
    """qkv: (B, S, 3H) bf16 packed [Q|K|V]; add_mask: (B, 1, S) f32 additive.

    Returns context in (B, S, H) layout (heads merged on the lane axis)."""
    B, S, H3 = qkv.shape
    H = n_heads * head_dim
    scale = 1.0 / math.sqrt(head_dim)
    block_bytes = 2 * (S * H3 + S * H) + 4 * (S + S * S)
    return pl.pallas_call(
        functools.partial(_attention_kernel, n_heads=n_heads,
                          head_dim=head_dim, scale=scale),
        out_shape=jax.ShapeDtypeStruct((B, S, H), jnp.bfloat16),
        grid=(B,),
        in_specs=[
            pl.BlockSpec((1, S, H3), lambda b: (b, 0, 0)),
            pl.BlockSpec((1, 1, S), lambda b: (b, 0, 0)),
        ],
        out_specs=pl.BlockSpec((1, S, H), lambda b: (b, 0, 0)),
        compiler_params=_compiler_params(("parallel",), block_bytes),
    )(qkv, add_mask)
    # TODO(synk): for long sequences, additionally tile the query axis.


def _head_kernel(x_ref, pw_ref, pb_ref, cw_ref, cb_ref, o_ref):
    # Fused BertPooler (tanh(W x_cls + b)) + classifier, padded to 128 lanes.
    pooled = jnp.dot(x_ref[...], pw_ref[...], preferred_element_type=jnp.float32)
    pooled = jnp.tanh(pooled + pb_ref[...])
    logits = jnp.dot(pooled.astype(cw_ref.dtype), cw_ref[...],
                     preferred_element_type=jnp.float32) + cb_ref[...]
    o_ref[...] = logits


def pooler_classifier(cls_tok, pool_w, pool_b, cls_w_pad, cls_b_pad):
    B, H = cls_tok.shape
    Np = cls_w_pad.shape[1]
    return pl.pallas_call(
        _head_kernel,
        out_shape=jax.ShapeDtypeStruct((B, Np), jnp.float32),
        compiler_params=pltpu.CompilerParams(vmem_limit_bytes=32 << 20),
    )(cls_tok.astype(jnp.bfloat16), pool_w, pool_b.reshape(1, H),
      cls_w_pad, cls_b_pad.reshape(1, Np))


# ------------------------------ model (glue) --------------------------------

def init_params(key, cfg):
    H = cfg["hidden_size"]
    I = cfg["intermediate_size"]
    keys = iter(jax.random.split(key, 64))

    def normal(shape):
        return 0.02 * jax.random.normal(next(keys), shape, jnp.float32)

    params = dict(
        word_emb=normal((cfg["vocab_size"], H)),
        pos_emb=normal((cfg["max_position"], H)),
        type_emb=normal((cfg["type_vocab_size"], H)),
        emb_ln_g=jnp.ones((H,), jnp.float32),
        emb_ln_b=jnp.zeros((H,), jnp.float32),
        layers=[],
        pool_w=normal((H, H)),
        pool_b=jnp.zeros((H,), jnp.float32),
        cls_w=normal((H, cfg["num_labels"])),
        cls_b=jnp.zeros((cfg["num_labels"],), jnp.float32),
    )
    for _ in range(cfg["num_layers"]):
        params["layers"].append(dict(
            wq=normal((H, H)), bq=jnp.zeros((H,), jnp.float32),
            wk=normal((H, H)), bk=jnp.zeros((H,), jnp.float32),
            wv=normal((H, H)), bv=jnp.zeros((H,), jnp.float32),
            wo=normal((H, H)), bo=jnp.zeros((H,), jnp.float32),
            ln1_g=jnp.ones((H,), jnp.float32), ln1_b=jnp.zeros((H,), jnp.float32),
            wi=normal((H, I)), bi=jnp.zeros((I,), jnp.float32),
            wo2=normal((I, H)), bo2=jnp.zeros((H,), jnp.float32),
            ln2_g=jnp.ones((H,), jnp.float32), ln2_b=jnp.zeros((H,), jnp.float32),
        ))
    return params


def prepare_inference_params(params, cfg):
    """One-time weight prep: bf16 cast, fused QKV weights, padded classifier."""
    H = cfg["hidden_size"]
    n_pad = 128
    bf = lambda a: a.astype(jnp.bfloat16)
    cls_w_pad = jnp.zeros((H, n_pad), jnp.float32)
    cls_w_pad = cls_w_pad.at[:, :cfg["num_labels"]].set(params["cls_w"])
    cls_b_pad = jnp.zeros((n_pad,), jnp.float32)
    cls_b_pad = cls_b_pad.at[:cfg["num_labels"]].set(params["cls_b"])
    out = dict(
        word_emb=params["word_emb"],
        pos_emb=params["pos_emb"],
        type_emb=params["type_emb"],
        emb_ln_g=params["emb_ln_g"], emb_ln_b=params["emb_ln_b"],
        pool_w=bf(params["pool_w"]), pool_b=params["pool_b"],
        cls_w_pad=bf(cls_w_pad), cls_b_pad=cls_b_pad,
        layers=[],
    )
    for lyr in params["layers"]:
        out["layers"].append(dict(
            wqkv=bf(jnp.concatenate([lyr["wq"], lyr["wk"], lyr["wv"]], axis=1)),
            bqkv=jnp.concatenate([lyr["bq"], lyr["bk"], lyr["bv"]]),
            wo=bf(lyr["wo"]), bo=lyr["bo"],
            ln1_g=lyr["ln1_g"], ln1_b=lyr["ln1_b"],
            wi=bf(lyr["wi"]), bi=lyr["bi"],
            wo2=bf(lyr["wo2"]), bo2=lyr["bo2"],
            ln2_g=lyr["ln2_g"], ln2_b=lyr["ln2_b"],
        ))
    return out


def satd_relation_detector(iparams, input_ids, attention_mask, token_type_ids, cfg):
    """Mirrors SATDRelationDetector.forward (inference mode)."""
    B, S = input_ids.shape
    H = cfg["hidden_size"]
    nH = cfg["num_heads"]
    d = H // nH

    # --- BertEmbeddings (token/pos/type gathers are glue; LN is a kernel) ---
    pos_ids = jnp.arange(S)
    emb = (iparams["word_emb"][input_ids]
           + iparams["pos_emb"][pos_ids][None, :, :]
           + iparams["type_emb"][token_type_ids]).astype(jnp.float32)
    x = layernorm(emb.reshape(B * S, H), iparams["emb_ln_g"], iparams["emb_ln_b"])
    # dropout -> identity (eval)

    # additive attention mask (finite constant; masked rows stay NaN-free)
    add_mask = ((1.0 - attention_mask.astype(jnp.float32))
                * MASK_VALUE).reshape(B, 1, S)

    # --- BertEncoder layers ---
    for lyr in iparams["layers"]:
        qkv = linear(x, lyr["wqkv"], lyr["bqkv"])                # (B*S, 3H)
        ctx = attention(qkv.reshape(B, S, 3 * H), add_mask, nH, d)  # (B, S, H)
        attn_out = linear(ctx.reshape(B * S, H), lyr["wo"], lyr["bo"])
        x = layernorm(attn_out, lyr["ln1_g"], lyr["ln1_b"], residual=x)

        h1 = linear(x, lyr["wi"], lyr["bi"], act="gelu")         # fused GELU
        h2 = linear(h1, lyr["wo2"], lyr["bo2"])
        x = layernorm(h2, lyr["ln2_g"], lyr["ln2_b"], residual=x)

    # --- BertPooler + dropout(identity) + classifier (fused, padded head) ---
    cls_tok = x.reshape(B, S, H)[:, 0, :]                        # (B, H)
    logits_pad = pooler_classifier(cls_tok, iparams["pool_w"], iparams["pool_b"],
                                   iparams["cls_w_pad"], iparams["cls_b_pad"])
    return logits_pad[:, :cfg["num_labels"]]


# --------------------------------- main -------------------------------------

if __name__ == "__main__":
    cfg = dict(
        vocab_size=100,
        hidden_size=32,
        num_heads=2,
        num_layers=2,
        intermediate_size=64,
        max_position=16,
        type_vocab_size=2,
        num_labels=3,
    )
    B, S = 2, 8

    key = jax.random.PRNGKey(0)
    pkey, ikey = jax.random.split(key)
    params = init_params(pkey, cfg)
    iparams = prepare_inference_params(params, cfg)

    input_ids = jax.random.randint(ikey, (B, S), 0, cfg["vocab_size"], dtype=jnp.int32)
    token_type_ids = jnp.concatenate(
        [jnp.zeros((B, S // 2), jnp.int32), jnp.ones((B, S // 2), jnp.int32)], axis=1)
    attention_mask = jnp.array([[1] * S, [1] * (S - 2) + [0, 0]], dtype=jnp.int32)

    logits = satd_relation_detector(iparams, input_ids, attention_mask,
                                    token_type_ids, cfg)
    logits = jax.block_until_ready(logits)
    assert logits.shape == (B, cfg["num_labels"])
    assert bool(jnp.all(jnp.isfinite(logits)))
    print("KERNEL_OK")
</pallas_src>

<mosaic_0001>
module attributes {stable_mosaic.version = 11 : i64} {
  func.func @_ln_kernel(%arg0: i32, %arg1: memref<16x32xf32, #tpu.memory_space<vmem>>, %arg2: memref<1x32xf32, #tpu.memory_space<vmem>>, %arg3: memref<1x32xf32, #tpu.memory_space<vmem>>, %arg4: memref<16x32xbf16, #tpu.memory_space<vmem>>) attributes {dimension_semantics = [#tpu.dimension_semantics<parallel>], iteration_bounds = array<i64: 1>, scalar_prefetch = 0 : i64, scratch_operands = 0 : i64, tpu.core_type = #tpu.core_type<tc>, window_params = [{transform_indices = @transform_0, window_bounds = array<i64: 16, 32>}, {pipeline_mode = #tpu.pipeline_mode<synchronous>, transform_indices = @transform_1, window_bounds = array<i64: 1, 32>}, {pipeline_mode = #tpu.pipeline_mode<synchronous>, transform_indices = @transform_2, window_bounds = array<i64: 1, 32>}, {transform_indices = @transform_3, window_bounds = array<i64: 16, 32>}]} {
    %c0 = arith.constant 0 : index
    %c0_0 = arith.constant 0 : index
    %0 = vector.load %arg1[%c0, %c0_0] : memref<16x32xf32, #tpu.memory_space<vmem>>, vector<16x32xf32>
    %cst = arith.constant dense<0.000000e+00> : vector<16xf32>
    %1 = vector.multi_reduction <add>, %0, %cst [1] : vector<16x32xf32> to vector<16xf32>
    %2 = vector.shape_cast %1 : vector<16xf32> to vector<16x1xf32>
    %cst_1 = arith.constant 3.200000e+01 : f32
    %3 = vector.broadcast %cst_1 : f32 to vector<16x1xf32>
    %4 = arith.divf %2, %3 : vector<16x1xf32>
    %5 = vector.broadcast %4 : vector<16x1xf32> to vector<16x32xf32>
    %6 = arith.subf %0, %5 : vector<16x32xf32>
    %7 = arith.mulf %6, %6 : vector<16x32xf32>
    %cst_2 = arith.constant dense<0.000000e+00> : vector<16xf32>
    %8 = vector.multi_reduction <add>, %7, %cst_2 [1] : vector<16x32xf32> to vector<16xf32>
    %9 = vector.shape_cast %8 : vector<16xf32> to vector<16x1xf32>
    %cst_3 = arith.constant 3.200000e+01 : f32
    %10 = vector.broadcast %cst_3 : f32 to vector<16x1xf32>
    %11 = arith.divf %9, %10 : vector<16x1xf32>
    %cst_4 = arith.constant 9.99999996E-13 : f32
    %12 = vector.broadcast %cst_4 : f32 to vector<16x1xf32>
    %13 = arith.addf %11, %12 : vector<16x1xf32>
    %14 = math.rsqrt %13 : vector<16x1xf32>
    %15 = vector.broadcast %14 : vector<16x1xf32> to vector<16x32xf32>
    %16 = arith.mulf %6, %15 : vector<16x32xf32>
    %c0_5 = arith.constant 0 : index
    %c0_6 = arith.constant 0 : index
    %17 = vector.load %arg2[%c0_5, %c0_6] : memref<1x32xf32, #tpu.memory_space<vmem>>, vector<1x32xf32>
    %18 = vector.broadcast %17 : vector<1x32xf32> to vector<16x32xf32>
    %19 = arith.mulf %16, %18 : vector<16x32xf32>
    %c0_7 = arith.constant 0 : index
    %c0_8 = arith.constant 0 : index
    %20 = vector.load %arg3[%c0_7, %c0_8] : memref<1x32xf32, #tpu.memory_space<vmem>>, vector<1x32xf32>
    %21 = vector.broadcast %20 : vector<1x32xf32> to vector<16x32xf32>
    %22 = arith.addf %19, %21 : vector<16x32xf32>
    %23 = arith.truncf %22 : vector<16x32xf32> to vector<16x32xbf16>
    %c0_9 = arith.constant 0 : index
    %c0_10 = arith.constant 0 : index
    %24 = vector.load %arg4[%c0_9, %c0_10] : memref<16x32xbf16, #tpu.memory_space<vmem>>, vector<16x32xbf16>
    tpu.vector_store %arg4[%c0_9, %c0_10], %23 {strides = array<i32>} : memref<16x32xbf16, #tpu.memory_space<vmem>>, vector<16x32xbf16>,
    return
  }
  func.func @transform_0(%arg0: i32) -> (i32, i32) {
    %c0_i32 = arith.constant 0 : i32
    %c0_i32_0 = arith.constant 0 : i32
    return %arg0, %c0_i32 : i32, i32
  }
  func.func @transform_1(%arg0: i32) -> (i32, i32) {
    %c0_i32 = arith.constant 0 : i32
    %c0_i32_0 = arith.constant 0 : i32
    %c0_i32_1 = arith.constant 0 : i32
    return %c0_i32, %c0_i32_0 : i32, i32
  }
  func.func @transform_2(%arg0: i32) -> (i32, i32) {
    %c0_i32 = arith.constant 0 : i32
    %c0_i32_0 = arith.constant 0 : i32
    %c0_i32_1 = arith.constant 0 : i32
    return %c0_i32, %c0_i32_0 : i32, i32
  }
  func.func @transform_3(%arg0: i32) -> (i32, i32) {
    %c0_i32 = arith.constant 0 : i32
    %c0_i32_0 = arith.constant 0 : i32
    return %arg0, %c0_i32 : i32, i32
  }
}

</mosaic_0001>

<llo_original>
// kernel: tpu_custom_call.1
$region0: #{tpu_custom_call.1}
  #allocation0 [shape = 'u32[]', space=smem, size = 0x4, offset = 0x4, fixed_abs, tag = 'smem constant byte address 0x4 - core index']
  #allocation1 [shape = 'u32[72,128]{1,0:T(1,128)}', space=vmem, size = 0x9000, scoped, tag = 'internal scratch']
  %s0 = inlined_call_operand.hbm [shape: f32[16,32], index: 0, kind: input, shape index: {}]
  %s1 = inlined_call_operand.hbm [shape: f32[1,32], index: 1, kind: input, shape index: {}]
  %s2 = inlined_call_operand.vmem [shape: f32[1,32], index: 2, kind: input, shape index: {}]
  %s3 = inlined_call_operand.hbm [shape: bf16[16,32], index: 3, kind: output, shape index: {}]
  %s4 = sld [smem:[#allocation0]]
  $region30: #{tpu_custom_call.1} parent=0
    _
  %s6 = ssub.s32 1, %s4
  %s7 = scalar_select 0, %s6, %s4
  $region1: #{tpu_custom_call.1} parent=0
    #allocation2 [shape = 'u8[8192]{0}', space=vmem, size = 0x2000, scoped, tag = 'input window, operand 0, single buffered']
    #allocation3 [shape = 's32[1]{0}', space=sflag, size = 0x4, scoped, tag = 'scoped memory for tpu_custom_call.1']
    #allocation4 [shape = 's32[1]{0}', space=sflag, size = 0x4, scoped, tag = 'scoped memory for tpu_custom_call.1']
    #allocation5 [shape = 'u8[512]{0}', space=vmem, size = 0x400, scoped, tag = 'input window, operand 1, single buffered']
    #allocation6 [shape = 's32[1]{0}', space=sflag, size = 0x4, scoped, tag = 'scoped memory for tpu_custom_call.1']
    #allocation7 [shape = 'u8[4096]{0}', space=vmem, size = 0x1000, scoped, tag = 'output window, operand 0, single buffered']
    %8 = vsyncpa [#allocation3], 0
    %9 = vsyncpa [#allocation6], 0
    %10 = vsyncpa [#allocation4], 0
    // Predicated region
    $region2: #{tpu_custom_call.1} parent=1 // pred_check
      _
    $region3: #{tpu_custom_call.1} parent=1 // pred_check_branch
      %12 = sbr.rel (0) target = $region5
    $region4: #{tpu_custom_call.1} parent=1 // pred_region
      %14 = vsyncadd [#allocation3], 0
      %s15 = sshll.u32 %s0, 4
      %s16 = int_to_ptr.hbm [resolvable:$true] %s15
      %s17 = sshll.u32 [#allocation2], 4
      %s18 = int_to_ptr.vmem [resolvable:$true] %s17
      %23 = dma.hbm_to_vmem [thread:$0]  %s16, 256, %s18, [#allocation3], 128, 128, 8
    $region5: #{tpu_custom_call.1} parent=1 // pred_fallthru
      _
    // Predicated region
    $region6: #{tpu_custom_call.1} parent=1 // pred_check
      _
    $region7: #{tpu_custom_call.1} parent=1 // pred_check_branch
      %25 = sbr.rel (0) target = $region9
    $region8: #{tpu_custom_call.1} parent=1 // pred_region
      %27 = vsyncadd [#allocation6], 0
      %s29 = sshll.u32 %s1, 4
      %s30 = int_to_ptr.hbm [resolvable:$true] %s29
      %s31 = sshll.u32 [#allocation5], 4
      %s32 = int_to_ptr.vmem [resolvable:$true] %s31
      %34 = dma.hbm_to_vmem [thread:$0]  %s30, 16, %s32, [#allocation6]
    $region9: #{tpu_custom_call.1} parent=1 // pred_fallthru
      _
    // Predicated region
    $region10: #{tpu_custom_call.1} parent=1 // pred_check
      _
    $region11: #{tpu_custom_call.1} parent=1 // pred_check_branch
      %36 = sbr.rel (0) target = $region13
    $region12: #{tpu_custom_call.1} parent=1 // pred_region
      _
    $region13: #{tpu_custom_call.1} parent=1 // pred_fallthru
      _
    // Predicated region
    $region14: #{tpu_custom_call.1} parent=1 // pred_check
      _
    $region15: #{tpu_custom_call.1} parent=1 // pred_check_branch
      %38 = sbr.rel (0) target = $region17
    $region16: #{tpu_custom_call.1} parent=1 // pred_region
      %40 = dma.done [#allocation3], 256
    $region17: #{tpu_custom_call.1} parent=1 // pred_fallthru
      _
    // Predicated region
    $region18: #{tpu_custom_call.1} parent=1 // pred_check
      _
    $region19: #{tpu_custom_call.1} parent=1 // pred_check_branch
      %42 = sbr.rel (0) target = $region21
    $region20: #{tpu_custom_call.1} parent=1 // pred_region
      %44 = dma.done [#allocation6], 16
    $region21: #{tpu_custom_call.1} parent=1 // pred_fallthru
      _
    %v45 = vld [vmem:[#allocation2] sm:$0xff]
    %v46 = vld [vmem:[#allocation2 + $0x8] sm:$0xff]
    %vm47 = vcmask 261120
    %v48 = vsel %vm47, %v45, 0.0
    %49 = vadd.xlane.f32.xlu0 %v48
    %v50 = vpop.xlane.xlu0 %49
    %v51 = vsel %vm47, %v46, 0.0
    %52 = vadd.xlane.f32.xlu0 %v51
    %v53 = vpop.xlane.xlu0 %52
    %v54 = vrcp.pop 32.0
    %v55 = vmul.f32 32.0, %v54
    %v56 = vsub.f32 1.0, %v55
    %v57 = vmul.f32 %v54, %v56
    %v58 = vadd.f32 %v54, %v57
    %vm59 = vweird.f32 %v54
    %v60 = vsel %vm59, %v54, %v58
    %v61 = vmul.f32 %v50, %v60
    %v62 = vmul.f32 %v53, %v60
    %v63 = vsub.f32 %v45, %v61
    %v64 = vsub.f32 %v46, %v62
    %v65 = vmul.f32 %v63, %v63
    %v66 = vmul.f32 %v64, %v64
    %v67 = vsel %vm47, %v65, 0.0
    %68 = vadd.xlane.f32.xlu0 %v67
    %v69 = vpop.xlane.xlu0 %68
    %v70 = vsel %vm47, %v66, 0.0
    %71 = vadd.xlane.f32.xlu0 %v70
    %v72 = vpop.xlane.xlu0 %71
    %v73 = vmul.f32 %v69, %v60
    %v74 = vmul.f32 %v72, %v60
    %v75 = vadd.f32 %v73, 1e-12
    %v76 = vadd.f32 %v74, 1e-12
    %v77 = vrsqrt.pop %v75
    %v78 = vmul.f32 %v77, %v75
    %v79 = vmul.f32 %v78, %v77
    %v80 = vmul.f32 0.5, %v79
    %v81 = vsub.f32 1.5, %v80
    %v82 = vmul.f32 %v77, %v81
    %vm83 = vweird.f32 %v75
    %vm84 = vweird.f32 %v77
    %vm85 = vmor %vm83, %vm84
    %v86 = vsel %vm85, %v77, %v82
    %v87 = vrsqrt.pop %v76
    %v88 = vmul.f32 %v87, %v76
    %v89 = vmul.f32 %v88, %v87
    %v90 = vmul.f32 0.5, %v89
    %v91 = vsub.f32 1.5, %v90
    %v92 = vmul.f32 %v87, %v91
    %vm93 = vweird.f32 %v76
    %vm94 = vweird.f32 %v87
    %vm95 = vmor %vm93, %vm94
    %v96 = vsel %vm95, %v87, %v92
    %v97 = vmul.f32 %v63, %v86
    %v98 = vmul.f32 %v64, %v96
    %v99 = vld [vmem:[#allocation5] sm:$0x1]
    %v101 = vperm.slane %v99, 0
    %v103 = vmul.f32 %v97, %v101
    %v104 = vmul.f32 %v98, %v101
    %v105 = vld [vmem:[%s2] sm:$0x1]
    %v107 = vperm.slane %v105, 0
    %v109 = vadd.f32 %v103, %v107
    %v110 = vadd.f32 %v104, %v107
    %v111 = vpack.c.bf16 %v109, %v109
    %v112 = vpack.c.bf16 %v110, %v110
    %vm113 = vcmask 257024
    %114 = vst.msk [vmem:[#allocation7] sm:$0xf] %vm113, %v111
    %115 = vst.msk [vmem:[#allocation7 + $0x4] sm:$0xf] %vm113, %v112
    // Predicated region
    $region22: #{tpu_custom_call.1} parent=1 // pred_check
      _
    $region23: #{tpu_custom_call.1} parent=1 // pred_check_branch
      %117 = sbr.rel (0) target = $region25
    $region24: #{tpu_custom_call.1} parent=1 // pred_region
      %119 = vsyncadd [#allocation4], 0
      %s120 = sshll.u32 [#allocation7], 4
      %s121 = int_to_ptr.vmem [resolvable:$true] %s120
      %s122 = sshll.u32 %s3, 4
      %s123 = int_to_ptr.hbm [resolvable:$true] %s122
      %128 = dma.vmem_to_hbm [thread:$0]  %s121, 128, %s123, [#allocation4], 64, 64, 4
    $region25: #{tpu_custom_call.1} parent=1 // pred_fallthru
      _
    // Predicated region
    $region26: #{tpu_custom_call.1} parent=1 // pred_check
      _
    $region27: #{tpu_custom_call.1} parent=1 // pred_check_branch
      %130 = sbr.rel (0) target = $region29
    $region28: #{tpu_custom_call.1} parent=1 // pred_region
      %132 = dma.done [#allocation4], 128
    $region29: #{tpu_custom_call.1} parent=1 // pred_fallthru
      _
    %133 = vsyncpa [#allocation3], 1
    %134 = vsyncpa [#allocation6], 1
    %135 = vsyncpa [#allocation4], 1

</llo_original>
